<compile_context>
chip_gen: v7x
topology: tpu7x:2x2x1
jax: 0.10.0
libtpu: 0.0.40
codegen_flags: <defaults>
</compile_context>

<pallas_src>
import functools
import math

import numpy as np
import jax
import jax.numpy as jnp
from jax.experimental import pallas as pl
from jax.experimental.pallas import tpu as pltpu


# ----------------------------------------------------------------------------
# Fused SWT kernel: all levels, one batch tile per grid step
# ----------------------------------------------------------------------------
def _swt_fused_kernel(rev_hi_ref, rev_lo_ref, x_ref, out_ref, *,
                      n_levels, filt_len, sig_len):
    """Fused stationary wavelet transform over one (BT, S) batch tile.

    rev_hi_ref : (1, F)  f32 SMEM   time-reversed base high-pass filter
    rev_lo_ref : (1, F)  f32 SMEM   time-reversed base low-pass  filter
    x_ref      : (BT, S) f32 VMEM   batch tile of the input signal
    out_ref    : (BT, (n_levels+1)*S) f32 VMEM
                 lane-packed [cD_0 | cD_1 | ... | cD_{L-1} | cA_{L-1}]
    """
    F = filt_len
    S = sig_len

    # Hoist the 2*F SMEM scalar reads out of the unrolled level/tap loops so
    # the scalar loads + vreg splats land in the prologue.
    hi_taps = [rev_hi_ref[0, j] for j in range(F)]
    lo_taps = [rev_lo_ref[0, j] for j in range(F)]

    def window(x, shift):
        # Circular window: w[:, t] = x[:, (t + shift) % S] with static shift.
        # pltpu.roll follows the np.roll convention (out[t] = in[(t-amt)%S]),
        # so rotate by amt = (-shift) % S.  Axis must be non-negative.
        amt = (-shift) % S
        if amt == 0:
            return x
        return pltpu.roll(x, amt, axis=1)          # XLU rotate, VALU-free

    # Running cA stays resident in vregs/VMEM across the unrolled level loop
    # ("a trous": level i correlates the F base taps at dilation 2**i, so no
    # multiplies by the exact zeros of the upsampled filters).
    x = x_ref[...]
    for lvl in range(n_levels):
        d = 1 << lvl                               # dilation 2**lvl
        acc_d = jnp.zeros_like(x)
        acc_a = jnp.zeros_like(x)
        for jj in range(F):                        # only the F nonzero taps
            w = window(x, d * (jj + 1 - F // 2))
            acc_d = acc_d + hi_taps[jj] * w
            acc_a = acc_a + lo_taps[jj] * w
        out_ref[:, lvl * S:(lvl + 1) * S] = acc_d  # cD_lvl (128-aligned if S%128==0)
        x = acc_a                                  # next level runs on cA
    out_ref[:, n_levels * S:(n_levels + 1) * S] = x  # final cA


# ----------------------------------------------------------------------------
# Tile selection: sublane-aligned, VMEM-budgeted, >= 2 grid steps when possible
# ----------------------------------------------------------------------------
def _choose_batch_tile(B, requested, S, n_levels):
    # Double-buffered input + double-buffered output bytes per batch row.
    per_row_bytes = (2 + 2 * (n_levels + 1)) * S * 4
    vmem_cap_rows = max(8, (40 << 20) // max(per_row_bytes, 1))
    if B <= 8:
        return B                      # single block == full batch dim (legal)
    bt = min(requested, vmem_cap_rows)
    # Ensure at least two grid steps so v7x's two TensorCores both get work.
    half_rounded = ((-(-B // 2)) + 7) // 8 * 8    # ceil(B/2) rounded up to 8
    bt = min(bt, half_rounded)
    bt = max(8, (bt // 8) * 8)                    # sublane-aligned
    return bt


# ----------------------------------------------------------------------------
# Wrapper
# ----------------------------------------------------------------------------
def wavelet_forward(signal, hi, lo, n_levels, *, batch_tile=64):
    """Stationary wavelet transform forward (matches the PyTorch module).

    signal : (B, 1, S) float32 (NCW, single channel)
    hi, lo : (1, 1, F) float32 learnable filters
    returns (B, n_levels + 1, S): [cD_0 .. cD_{L-1}, cA_{L-1}]
    """
    B, C, S = signal.shape
    assert C == 1, "Wavelet forward expects a single-channel signal (B, 1, S)"
    F = int(hi.shape[-1])
    assert n_levels >= 1
    # TODO(synk): odd filter / odd signal lengths hit the zero-pad boundary of
    # the original formulation; the fused kernel supports the even/even case.
    assert F % 2 == 0, "fused SWT kernel requires an even filter length"
    assert S % 2 == 0, "fused SWT kernel requires an even signal length"
    assert (F << (n_levels - 1)) // 2 <= S, (
        "circular extension longer than the signal (the PyTorch module's "
        "F.pad(mode='circular') has the same restriction)")

    x = signal[:, 0, :].astype(jnp.float32)                  # (B, S)
    rev_hi = hi[0, 0, ::-1].astype(jnp.float32).reshape(1, F)
    rev_lo = lo[0, 0, ::-1].astype(jnp.float32).reshape(1, F)

    BT = _choose_batch_tile(B, batch_tile, S, n_levels)
    nb = pl.cdiv(B, BT)                 # ragged last block: no wrapper jnp.pad
    out_w = (n_levels + 1) * S

    kernel = functools.partial(
        _swt_fused_kernel, n_levels=n_levels, filt_len=F, sig_len=S)

    # Raise the scoped-VMEM limit only when the double-buffered working set
    # needs it (keeps defaults for small problems; caps below v7x's 64 MiB).
    vmem_need = 2 * BT * S * 4 + 2 * BT * out_w * 4 + (2 << 20)
    cp_kwargs = dict(dimension_semantics=("parallel",))      # megacore on v7x
    if vmem_need > (32 << 20):
        cp_kwargs["vmem_limit_bytes"] = int(min(vmem_need, 56 << 20))

    out2d = pl.pallas_call(
        kernel,
        out_shape=jax.ShapeDtypeStruct((B, out_w), jnp.float32),
        grid=(nb,),
        in_specs=[
            pl.BlockSpec(memory_space=pltpu.MemorySpace.SMEM),   # rev_hi
            pl.BlockSpec(memory_space=pltpu.MemorySpace.SMEM),   # rev_lo
            pl.BlockSpec((BT, S), lambda b: (b, 0)),             # signal tile
        ],
        out_specs=pl.BlockSpec((BT, out_w), lambda b: (b, 0)),
        compiler_params=pltpu.CompilerParams(**cp_kwargs),
    )(rev_hi, rev_lo, x)

    # Free reshape: splits a contiguous trailing dim.
    return out2d.reshape(B, n_levels + 1, S)


# ----------------------------------------------------------------------------
# Pure-JAX transcription of the PyTorch module's forward (ground-truth check)
# ----------------------------------------------------------------------------
def _upsample_filter(f):
    # F.conv_transpose1d(f, [1, 0], stride=2): [f0, 0, f1, 0, ..., f_{L-1}, 0]
    L = f.shape[0]
    return jnp.stack([f, jnp.zeros_like(f)], axis=1).reshape(2 * L)


def wavelet_forward_reference(signal, hi, lo, n_levels):
    B, C, s = signal.shape
    x = signal[:, 0, :].astype(jnp.float32)
    hi_f = hi[0, 0].astype(jnp.float32)
    lo_f = lo[0, 0].astype(jnp.float32)
    cD_list, cA = [], None
    for _ in range(n_levels):
        lf = lo_f.shape[0]
        xs = x
        if xs.shape[1] % 2 != 0:                         # periodized_extension
            xs = jnp.concatenate([xs, xs[:, -1:]], axis=1)
        p = lf // 2
        xs = jnp.concatenate([xs[:, -p:], xs, xs[:, :p]], axis=1)
        pad = lf - 1                                     # F.pad + conv1d + keep
        xp = jnp.pad(xs, ((0, 0), (pad, pad)))
        slab = xp[:, lf: lf + s + lf - 1]
        wins = jnp.stack([slab[:, k:k + s] for k in range(lf)], axis=-1)
        # Elementwise multiply + reduce keeps the reference in exact f32
        # (avoids TPU default-precision bf16 matmul skewing the comparison).
        cd = jnp.sum(wins * hi_f[::-1], axis=-1)
        ca = jnp.sum(wins * lo_f[::-1], axis=-1)
        cD_list.append(cd)
        cA = ca
        hi_f = _upsample_filter(hi_f)                    # next-level filters
        lo_f = _upsample_filter(lo_f)
        x = ca
    return jnp.concatenate([jnp.stack(cD_list, 1), cA[:, None, :]], axis=1)


def init_filters(key, filter_size):
    """Deterministic stand-in for the module's xavier-uniform init + constraints."""
    bound = math.sqrt(6.0 / (2.0 * filter_size))   # fan_in = fan_out = F
    hi = jax.random.uniform(key, (1, 1, filter_size), dtype=jnp.float32,
                            minval=-bound, maxval=bound)
    hi = hi - hi.mean()
    hi = hi / jnp.sqrt(jnp.sum(hi ** 2))           # unit energy
    lo = hi[:, :, ::-1]                            # reverse
    odd = jnp.arange(1, filter_size - 1, 2)        # torch.arange(1, F-1, 2)
    lo = lo.at[:, :, odd].set(lo[:, :, odd] * -1.0)
    return hi, lo


# TODO(synk): `compute_all_filters` / `reconstruction` / `idwt` are not part of
# the module's forward() and are therefore not implemented here.

if __name__ == "__main__":
    B, S = 4, 128
    n_levels, filter_size = 3, 8

    key = jax.random.PRNGKey(0)
    k_sig, k_filt = jax.random.split(key)

    hi, lo = init_filters(k_filt, filter_size)             # (1, 1, 8) each
    signal = jax.random.normal(k_sig, (B, 1, S), dtype=jnp.float32)

    out = wavelet_forward(signal, hi, lo, n_levels)
    out = jax.block_until_ready(out)
    assert out.shape == (B, n_levels + 1, S), out.shape

    # Validate the fused / a-trous / circular kernel against the original math.
    ref = wavelet_forward_reference(signal, hi, lo, n_levels)
    np.testing.assert_allclose(np.asarray(out), np.asarray(jax.device_get(ref)),
                               rtol=1e-4, atol=1e-4)

    print("KERNEL_OK")
</pallas_src>

<mosaic_0001>
module attributes {stable_mosaic.version = 11 : i64} {
  func.func @_swt_fused_kernel(%arg0: i32, %arg1: memref<1x8xf32, #tpu.memory_space<smem>>, %arg2: memref<1x8xf32, #tpu.memory_space<smem>>, %arg3: memref<4x128xf32, #tpu.memory_space<vmem>>, %arg4: memref<4x512xf32, #tpu.memory_space<vmem>>) attributes {dimension_semantics = [#tpu.dimension_semantics<parallel>], iteration_bounds = array<i64: 1>, scalar_prefetch = 0 : i64, scratch_operands = 0 : i64, tpu.core_type = #tpu.core_type<tc>, window_params = [{transform_indices = @transform_0, window_bounds = array<i64: 1, 8>}, {transform_indices = @transform_1, window_bounds = array<i64: 1, 8>}, {transform_indices = @transform_2, window_bounds = array<i64: 4, 128>}, {transform_indices = @transform_3, window_bounds = array<i64: 4, 512>}]} {
    %c0 = arith.constant 0 : index
    %c0_0 = arith.constant 0 : index
    %0 = memref.load %arg1[%c0, %c0_0] : memref<1x8xf32, #tpu.memory_space<smem>>
    %c0_1 = arith.constant 0 : index
    %c1 = arith.constant 1 : index
    %1 = memref.load %arg1[%c0_1, %c1] : memref<1x8xf32, #tpu.memory_space<smem>>
    %c0_2 = arith.constant 0 : index
    %c2 = arith.constant 2 : index
    %2 = memref.load %arg1[%c0_2, %c2] : memref<1x8xf32, #tpu.memory_space<smem>>
    %c0_3 = arith.constant 0 : index
    %c3 = arith.constant 3 : index
    %3 = memref.load %arg1[%c0_3, %c3] : memref<1x8xf32, #tpu.memory_space<smem>>
    %c0_4 = arith.constant 0 : index
    %c4 = arith.constant 4 : index
    %4 = memref.load %arg1[%c0_4, %c4] : memref<1x8xf32, #tpu.memory_space<smem>>
    %c0_5 = arith.constant 0 : index
    %c5 = arith.constant 5 : index
    %5 = memref.load %arg1[%c0_5, %c5] : memref<1x8xf32, #tpu.memory_space<smem>>
    %c0_6 = arith.constant 0 : index
    %c6 = arith.constant 6 : index
    %6 = memref.load %arg1[%c0_6, %c6] : memref<1x8xf32, #tpu.memory_space<smem>>
    %c0_7 = arith.constant 0 : index
    %c7 = arith.constant 7 : index
    %7 = memref.load %arg1[%c0_7, %c7] : memref<1x8xf32, #tpu.memory_space<smem>>
    %c0_8 = arith.constant 0 : index
    %c0_9 = arith.constant 0 : index
    %8 = memref.load %arg2[%c0_8, %c0_9] : memref<1x8xf32, #tpu.memory_space<smem>>
    %c0_10 = arith.constant 0 : index
    %c1_11 = arith.constant 1 : index
    %9 = memref.load %arg2[%c0_10, %c1_11] : memref<1x8xf32, #tpu.memory_space<smem>>
    %c0_12 = arith.constant 0 : index
    %c2_13 = arith.constant 2 : index
    %10 = memref.load %arg2[%c0_12, %c2_13] : memref<1x8xf32, #tpu.memory_space<smem>>
    %c0_14 = arith.constant 0 : index
    %c3_15 = arith.constant 3 : index
    %11 = memref.load %arg2[%c0_14, %c3_15] : memref<1x8xf32, #tpu.memory_space<smem>>
    %c0_16 = arith.constant 0 : index
    %c4_17 = arith.constant 4 : index
    %12 = memref.load %arg2[%c0_16, %c4_17] : memref<1x8xf32, #tpu.memory_space<smem>>
    %c0_18 = arith.constant 0 : index
    %c5_19 = arith.constant 5 : index
    %13 = memref.load %arg2[%c0_18, %c5_19] : memref<1x8xf32, #tpu.memory_space<smem>>
    %c0_20 = arith.constant 0 : index
    %c6_21 = arith.constant 6 : index
    %14 = memref.load %arg2[%c0_20, %c6_21] : memref<1x8xf32, #tpu.memory_space<smem>>
    %c0_22 = arith.constant 0 : index
    %c7_23 = arith.constant 7 : index
    %15 = memref.load %arg2[%c0_22, %c7_23] : memref<1x8xf32, #tpu.memory_space<smem>>
    %c0_24 = arith.constant 0 : index
    %c0_25 = arith.constant 0 : index
    %16 = vector.load %arg3[%c0_24, %c0_25] : memref<4x128xf32, #tpu.memory_space<vmem>>, vector<4x128xf32>
    %cst = arith.constant 0.000000e+00 : f32
    %17 = vector.broadcast %cst : f32 to vector<4x128xf32>
    %cst_26 = arith.constant 0.000000e+00 : f32
    %18 = vector.broadcast %cst_26 : f32 to vector<4x128xf32>
    %c3_i32 = arith.constant 3 : i32
    %19 = tpu.dynamic_rotate %16 by %c3_i32 dim 1 : vector<4x128xf32>, i32 -> vector<4x128xf32>
    %20 = vector.broadcast %0 : f32 to vector<4x128xf32>
    %21 = arith.mulf %20, %19 : vector<4x128xf32>
    %22 = arith.addf %17, %21 : vector<4x128xf32>
    %23 = vector.broadcast %8 : f32 to vector<4x128xf32>
    %24 = arith.mulf %23, %19 : vector<4x128xf32>
    %25 = arith.addf %18, %24 : vector<4x128xf32>
    %c2_i32 = arith.constant 2 : i32
    %26 = tpu.dynamic_rotate %16 by %c2_i32 dim 1 : vector<4x128xf32>, i32 -> vector<4x128xf32>
    %27 = vector.broadcast %1 : f32 to vector<4x128xf32>
    %28 = arith.mulf %27, %26 : vector<4x128xf32>
    %29 = arith.addf %22, %28 : vector<4x128xf32>
    %30 = vector.broadcast %9 : f32 to vector<4x128xf32>
    %31 = arith.mulf %30, %26 : vector<4x128xf32>
    %32 = arith.addf %25, %31 : vector<4x128xf32>
    %c1_i32 = arith.constant 1 : i32
    %33 = tpu.dynamic_rotate %16 by %c1_i32 dim 1 : vector<4x128xf32>, i32 -> vector<4x128xf32>
    %34 = vector.broadcast %2 : f32 to vector<4x128xf32>
    %35 = arith.mulf %34, %33 : vector<4x128xf32>
    %36 = arith.addf %29, %35 : vector<4x128xf32>
    %37 = vector.broadcast %10 : f32 to vector<4x128xf32>
    %38 = arith.mulf %37, %33 : vector<4x128xf32>
    %39 = arith.addf %32, %38 : vector<4x128xf32>
    %40 = vector.broadcast %3 : f32 to vector<4x128xf32>
    %41 = arith.mulf %40, %16 : vector<4x128xf32>
    %42 = arith.addf %36, %41 : vector<4x128xf32>
    %43 = vector.broadcast %11 : f32 to vector<4x128xf32>
    %44 = arith.mulf %43, %16 : vector<4x128xf32>
    %45 = arith.addf %39, %44 : vector<4x128xf32>
    %c127_i32 = arith.constant 127 : i32
    %46 = tpu.dynamic_rotate %16 by %c127_i32 dim 1 : vector<4x128xf32>, i32 -> vector<4x128xf32>
    %47 = vector.broadcast %4 : f32 to vector<4x128xf32>
    %48 = arith.mulf %47, %46 : vector<4x128xf32>
    %49 = arith.addf %42, %48 : vector<4x128xf32>
    %50 = vector.broadcast %12 : f32 to vector<4x128xf32>
    %51 = arith.mulf %50, %46 : vector<4x128xf32>
    %52 = arith.addf %45, %51 : vector<4x128xf32>
    %c126_i32 = arith.constant 126 : i32
    %53 = tpu.dynamic_rotate %16 by %c126_i32 dim 1 : vector<4x128xf32>, i32 -> vector<4x128xf32>
    %54 = vector.broadcast %5 : f32 to vector<4x128xf32>
    %55 = arith.mulf %54, %53 : vector<4x128xf32>
    %56 = arith.addf %49, %55 : vector<4x128xf32>
    %57 = vector.broadcast %13 : f32 to vector<4x128xf32>
    %58 = arith.mulf %57, %53 : vector<4x128xf32>
    %59 = arith.addf %52, %58 : vector<4x128xf32>
    %c125_i32 = arith.constant 125 : i32
    %60 = tpu.dynamic_rotate %16 by %c125_i32 dim 1 : vector<4x128xf32>, i32 -> vector<4x128xf32>
    %61 = vector.broadcast %6 : f32 to vector<4x128xf32>
    %62 = arith.mulf %61, %60 : vector<4x128xf32>
    %63 = arith.addf %56, %62 : vector<4x128xf32>
    %64 = vector.broadcast %14 : f32 to vector<4x128xf32>
    %65 = arith.mulf %64, %60 : vector<4x128xf32>
    %66 = arith.addf %59, %65 : vector<4x128xf32>
    %c124_i32 = arith.constant 124 : i32
    %67 = tpu.dynamic_rotate %16 by %c124_i32 dim 1 : vector<4x128xf32>, i32 -> vector<4x128xf32>
    %68 = vector.broadcast %7 : f32 to vector<4x128xf32>
    %69 = arith.mulf %68, %67 : vector<4x128xf32>
    %70 = arith.addf %63, %69 : vector<4x128xf32>
    %71 = vector.broadcast %15 : f32 to vector<4x128xf32>
    %72 = arith.mulf %71, %67 : vector<4x128xf32>
    %73 = arith.addf %66, %72 : vector<4x128xf32>
    %c0_27 = arith.constant 0 : index
    %c0_28 = arith.constant 0 : index
    %74 = vector.load %arg4[%c0_27, %c0_28] : memref<4x512xf32, #tpu.memory_space<vmem>>, vector<4x128xf32>
    tpu.vector_store %arg4[%c0_27, %c0_28], %70 {strides = array<i32>} : memref<4x512xf32, #tpu.memory_space<vmem>>, vector<4x128xf32>,
    %cst_29 = arith.constant 0.000000e+00 : f32
    %75 = vector.broadcast %cst_29 : f32 to vector<4x128xf32>
    %cst_30 = arith.constant 0.000000e+00 : f32
    %76 = vector.broadcast %cst_30 : f32 to vector<4x128xf32>
    %c6_i32 = arith.constant 6 : i32
    %77 = tpu.dynamic_rotate %73 by %c6_i32 dim 1 : vector<4x128xf32>, i32 -> vector<4x128xf32>
    %78 = vector.broadcast %0 : f32 to vector<4x128xf32>
    %79 = arith.mulf %78, %77 : vector<4x128xf32>
    %80 = arith.addf %75, %79 : vector<4x128xf32>
    %81 = vector.broadcast %8 : f32 to vector<4x128xf32>
    %82 = arith.mulf %81, %77 : vector<4x128xf32>
    %83 = arith.addf %76, %82 : vector<4x128xf32>
    %c4_i32 = arith.constant 4 : i32
    %84 = tpu.dynamic_rotate %73 by %c4_i32 dim 1 : vector<4x128xf32>, i32 -> vector<4x128xf32>
    %85 = vector.broadcast %1 : f32 to vector<4x128xf32>
    %86 = arith.mulf %85, %84 : vector<4x128xf32>
    %87 = arith.addf %80, %86 : vector<4x128xf32>
    %88 = vector.broadcast %9 : f32 to vector<4x128xf32>
    %89 = arith.mulf %88, %84 : vector<4x128xf32>
    %90 = arith.addf %83, %89 : vector<4x128xf32>
    %c2_i32_31 = arith.constant 2 : i32
    %91 = tpu.dynamic_rotate %73 by %c2_i32_31 dim 1 : vector<4x128xf32>, i32 -> vector<4x128xf32>
    %92 = vector.broadcast %2 : f32 to vector<4x128xf32>
    %93 = arith.mulf %92, %91 : vector<4x128xf32>
    %94 = arith.addf %87, %93 : vector<4x128xf32>
    %95 = vector.broadcast %10 : f32 to vector<4x128xf32>
    %96 = arith.mulf %95, %91 : vector<4x128xf32>
    %97 = arith.addf %90, %96 : vector<4x128xf32>
    %98 = vector.broadcast %3 : f32 to vector<4x128xf32>
    %99 = arith.mulf %98, %73 : vector<4x128xf32>
    %100 = arith.addf %94, %99 : vector<4x128xf32>
    %101 = vector.broadcast %11 : f32 to vector<4x128xf32>
    %102 = arith.mulf %101, %73 : vector<4x128xf32>
    %103 = arith.addf %97, %102 : vector<4x128xf32>
    %c126_i32_32 = arith.constant 126 : i32
    %104 = tpu.dynamic_rotate %73 by %c126_i32_32 dim 1 : vector<4x128xf32>, i32 -> vector<4x128xf32>
    %105 = vector.broadcast %4 : f32 to vector<4x128xf32>
    %106 = arith.mulf %105, %104 : vector<4x128xf32>
    %107 = arith.addf %100, %106 : vector<4x128xf32>
    %108 = vector.broadcast %12 : f32 to vector<4x128xf32>
    %109 = arith.mulf %108, %104 : vector<4x128xf32>
    %110 = arith.addf %103, %109 : vector<4x128xf32>
    %c124_i32_33 = arith.constant 124 : i32
    %111 = tpu.dynamic_rotate %73 by %c124_i32_33 dim 1 : vector<4x128xf32>, i32 -> vector<4x128xf32>
    %112 = vector.broadcast %5 : f32 to vector<4x128xf32>
    %113 = arith.mulf %112, %111 : vector<4x128xf32>
    %114 = arith.addf %107, %113 : vector<4x128xf32>
    %115 = vector.broadcast %13 : f32 to vector<4x128xf32>
    %116 = arith.mulf %115, %111 : vector<4x128xf32>
    %117 = arith.addf %110, %116 : vector<4x128xf32>
    %c122_i32 = arith.constant 122 : i32
    %118 = tpu.dynamic_rotate %73 by %c122_i32 dim 1 : vector<4x128xf32>, i32 -> vector<4x128xf32>
    %119 = vector.broadcast %6 : f32 to vector<4x128xf32>
    %120 = arith.mulf %119, %118 : vector<4x128xf32>
    %121 = arith.addf %114, %120 : vector<4x128xf32>
    %122 = vector.broadcast %14 : f32 to vector<4x128xf32>
    %123 = arith.mulf %122, %118 : vector<4x128xf32>
    %124 = arith.addf %117, %123 : vector<4x128xf32>
    %c120_i32 = arith.constant 120 : i32
    %125 = tpu.dynamic_rotate %73 by %c120_i32 dim 1 : vector<4x128xf32>, i32 -> vector<4x128xf32>
    %126 = vector.broadcast %7 : f32 to vector<4x128xf32>
    %127 = arith.mulf %126, %125 : vector<4x128xf32>
    %128 = arith.addf %121, %127 : vector<4x128xf32>
    %129 = vector.broadcast %15 : f32 to vector<4x128xf32>
    %130 = arith.mulf %129, %125 : vector<4x128xf32>
    %131 = arith.addf %124, %130 : vector<4x128xf32>
    %c0_34 = arith.constant 0 : index
    %c128 = arith.constant 128 : index
    %132 = vector.load %arg4[%c0_34, %c128] : memref<4x512xf32, #tpu.memory_space<vmem>>, vector<4x128xf32>
    tpu.vector_store %arg4[%c0_34, %c128], %128 {strides = array<i32>} : memref<4x512xf32, #tpu.memory_space<vmem>>, vector<4x128xf32>,
    %cst_35 = arith.constant 0.000000e+00 : f32
    %133 = vector.broadcast %cst_35 : f32 to vector<4x128xf32>
    %cst_36 = arith.constant 0.000000e+00 : f32
    %134 = vector.broadcast %cst_36 : f32 to vector<4x128xf32>
    %c12_i32 = arith.constant 12 : i32
    %135 = tpu.dynamic_rotate %131 by %c12_i32 dim 1 : vector<4x128xf32>, i32 -> vector<4x128xf32>
    %136 = vector.broadcast %0 : f32 to vector<4x128xf32>
    %137 = arith.mulf %136, %135 : vector<4x128xf32>
    %138 = arith.addf %133, %137 : vector<4x128xf32>
    %139 = vector.broadcast %8 : f32 to vector<4x128xf32>
    %140 = arith.mulf %139, %135 : vector<4x128xf32>
    %141 = arith.addf %134, %140 : vector<4x128xf32>
    %c8_i32 = arith.constant 8 : i32
    %142 = tpu.dynamic_rotate %131 by %c8_i32 dim 1 : vector<4x128xf32>, i32 -> vector<4x128xf32>
    %143 = vector.broadcast %1 : f32 to vector<4x128xf32>
    %144 = arith.mulf %143, %142 : vector<4x128xf32>
    %145 = arith.addf %138, %144 : vector<4x128xf32>
    %146 = vector.broadcast %9 : f32 to vector<4x128xf32>
    %147 = arith.mulf %146, %142 : vector<4x128xf32>
    %148 = arith.addf %141, %147 : vector<4x128xf32>
    %c4_i32_37 = arith.constant 4 : i32
    %149 = tpu.dynamic_rotate %131 by %c4_i32_37 dim 1 : vector<4x128xf32>, i32 -> vector<4x128xf32>
    %150 = vector.broadcast %2 : f32 to vector<4x128xf32>
    %151 = arith.mulf %150, %149 : vector<4x128xf32>
    %152 = arith.addf %145, %151 : vector<4x128xf32>
    %153 = vector.broadcast %10 : f32 to vector<4x128xf32>
    %154 = arith.mulf %153, %149 : vector<4x128xf32>
    %155 = arith.addf %148, %154 : vector<4x128xf32>
    %156 = vector.broadcast %3 : f32 to vector<4x128xf32>
    %157 = arith.mulf %156, %131 : vector<4x128xf32>
    %158 = arith.addf %152, %157 : vector<4x128xf32>
    %159 = vector.broadcast %11 : f32 to vector<4x128xf32>
    %160 = arith.mulf %159, %131 : vector<4x128xf32>
    %161 = arith.addf %155, %160 : vector<4x128xf32>
    %c124_i32_38 = arith.constant 124 : i32
    %162 = tpu.dynamic_rotate %131 by %c124_i32_38 dim 1 : vector<4x128xf32>, i32 -> vector<4x128xf32>
    %163 = vector.broadcast %4 : f32 to vector<4x128xf32>
    %164 = arith.mulf %163, %162 : vector<4x128xf32>
    %165 = arith.addf %158, %164 : vector<4x128xf32>
    %166 = vector.broadcast %12 : f32 to vector<4x128xf32>
    %167 = arith.mulf %166, %162 : vector<4x128xf32>
    %168 = arith.addf %161, %167 : vector<4x128xf32>
    %c120_i32_39 = arith.constant 120 : i32
    %169 = tpu.dynamic_rotate %131 by %c120_i32_39 dim 1 : vector<4x128xf32>, i32 -> vector<4x128xf32>
    %170 = vector.broadcast %5 : f32 to vector<4x128xf32>
    %171 = arith.mulf %170, %169 : vector<4x128xf32>
    %172 = arith.addf %165, %171 : vector<4x128xf32>
    %173 = vector.broadcast %13 : f32 to vector<4x128xf32>
    %174 = arith.mulf %173, %169 : vector<4x128xf32>
    %175 = arith.addf %168, %174 : vector<4x128xf32>
    %c116_i32 = arith.constant 116 : i32
    %176 = tpu.dynamic_rotate %131 by %c116_i32 dim 1 : vector<4x128xf32>, i32 -> vector<4x128xf32>
    %177 = vector.broadcast %6 : f32 to vector<4x128xf32>
    %178 = arith.mulf %177, %176 : vector<4x128xf32>
    %179 = arith.addf %172, %178 : vector<4x128xf32>
    %180 = vector.broadcast %14 : f32 to vector<4x128xf32>
    %181 = arith.mulf %180, %176 : vector<4x128xf32>
    %182 = arith.addf %175, %181 : vector<4x128xf32>
    %c112_i32 = arith.constant 112 : i32
    %183 = tpu.dynamic_rotate %131 by %c112_i32 dim 1 : vector<4x128xf32>, i32 -> vector<4x128xf32>
    %184 = vector.broadcast %7 : f32 to vector<4x128xf32>
    %185 = arith.mulf %184, %183 : vector<4x128xf32>
    %186 = arith.addf %179, %185 : vector<4x128xf32>
    %187 = vector.broadcast %15 : f32 to vector<4x128xf32>
    %188 = arith.mulf %187, %183 : vector<4x128xf32>
    %189 = arith.addf %182, %188 : vector<4x128xf32>
    %c0_40 = arith.constant 0 : index
    %c256 = arith.constant 256 : index
    %190 = vector.load %arg4[%c0_40, %c256] : memref<4x512xf32, #tpu.memory_space<vmem>>, vector<4x128xf32>
    tpu.vector_store %arg4[%c0_40, %c256], %186 {strides = array<i32>} : memref<4x512xf32, #tpu.memory_space<vmem>>, vector<4x128xf32>,
    %c0_41 = arith.constant 0 : index
    %c384 = arith.constant 384 : index
    %191 = vector.load %arg4[%c0_41, %c384] : memref<4x512xf32, #tpu.memory_space<vmem>>, vector<4x128xf32>
    tpu.vector_store %arg4[%c0_41, %c384], %189 {strides = array<i32>} : memref<4x512xf32, #tpu.memory_space<vmem>>, vector<4x128xf32>,
    return
  }
  func.func @transform_0(%arg0: i32) -> (i32, i32) {
    %c0_i32 = arith.constant 0 : i32
    %c0_i32_0 = arith.constant 0 : i32
    %c0_i32_1 = arith.constant 0 : i32
    return %c0_i32, %c0_i32_0 : i32, i32
  }
  func.func @transform_1(%arg0: i32) -> (i32, i32) {
    %c0_i32 = arith.constant 0 : i32
    %c0_i32_0 = arith.constant 0 : i32
    %c0_i32_1 = arith.constant 0 : i32
    return %c0_i32, %c0_i32_0 : i32, i32
  }
  func.func @transform_2(%arg0: i32) -> (i32, i32) {
    %c0_i32 = arith.constant 0 : i32
    %c0_i32_0 = arith.constant 0 : i32
    return %arg0, %c0_i32 : i32, i32
  }
  func.func @transform_3(%arg0: i32) -> (i32, i32) {
    %c0_i32 = arith.constant 0 : i32
    %c0_i32_0 = arith.constant 0 : i32
    return %arg0, %c0_i32 : i32, i32
  }
}

</mosaic_0001>

<llo_original>
// kernel: tpu_custom_call.1
$region0: #{tpu_custom_call.1}
  #allocation0 [shape = 'u32[]', space=smem, size = 0x4, offset = 0x4, fixed_abs, tag = 'smem constant byte address 0x4 - core index']
  #allocation1 [shape = 'u32[144,128]{1,0:T(1,128)}', space=vmem, size = 0x12000, scoped, tag = 'internal scratch']
  %s0 = inlined_call_operand.hbm [shape: f32[1,8], index: 0, kind: input, shape index: {}]
  %s1 = inlined_call_operand.vmem [shape: f32[1,8], index: 1, kind: input, shape index: {}]
  %s2 = inlined_call_operand.vmem [shape: f32[4,128], index: 2, kind: input, shape index: {}]
  %s3 = inlined_call_operand.hbm [shape: f32[4,512], index: 3, kind: output, shape index: {}]
  %s4 = sld [smem:[#allocation0]]
  $region30: #{tpu_custom_call.1} parent=0
    _
  %s6 = ssub.s32 1, %s4
  %s7 = scalar_select 0, %s6, %s4
  $region1: #{tpu_custom_call.1} parent=0
    #allocation2 [shape = 'u8[512]{0}', space=smem, size = 0x200, scoped, tag = 'input window, operand 0, single buffered']
    #allocation3 [shape = 's32[1]{0}', space=sflag, size = 0x4, scoped, tag = 'scoped memory for tpu_custom_call.1']
    #allocation4 [shape = 's32[1]{0}', space=sflag, size = 0x4, scoped, tag = 'scoped memory for tpu_custom_call.1']
    #allocation5 [shape = 's32[1]{0}', space=sflag, size = 0x4, scoped, tag = 'scoped memory for tpu_custom_call.1']
    #allocation6 [shape = 'u8[512]{0}', space=smem, size = 0x200, scoped, tag = 'input window, operand 1, single buffered']
    #allocation7 [shape = 'u8[8192]{0}', space=vmem, size = 0x2000, scoped, tag = 'output window, operand 0, single buffered']
    %8 = vsyncpa [#allocation4], 0
    %9 = vsyncpa [#allocation5], 0
    %10 = vsyncpa [#allocation3], 0
    // Predicated region
    $region2: #{tpu_custom_call.1} parent=1 // pred_check
      _
    $region3: #{tpu_custom_call.1} parent=1 // pred_check_branch
      %12 = sbr.rel (0) target = $region5
    $region4: #{tpu_custom_call.1} parent=1 // pred_region
      %s14 = ssub.s32 16, 16
      %15 = vsyncadd [#allocation4], %s14
      %18 = dma.hbm_to_smem %s0, 16, [#allocation2], [#allocation4]
    $region5: #{tpu_custom_call.1} parent=1 // pred_fallthru
      _
    // Predicated region
    $region6: #{tpu_custom_call.1} parent=1 // pred_check
      _
    $region7: #{tpu_custom_call.1} parent=1 // pred_check_branch
      %20 = sbr.rel (0) target = $region9
    $region8: #{tpu_custom_call.1} parent=1 // pred_region
      %s22 = ssub.s32 16, 16
      %23 = vsyncadd [#allocation5], %s22
      %s25 = sshll.u32 %s1, 4
      %s26 = int_to_ptr.vmem [resolvable:$true] %s25
      %28 = dma.vmem_to_smem %s26, 16, [#allocation6], [#allocation5]
    $region9: #{tpu_custom_call.1} parent=1 // pred_fallthru
      _
    // Predicated region
    $region10: #{tpu_custom_call.1} parent=1 // pred_check
      _
    $region11: #{tpu_custom_call.1} parent=1 // pred_check_branch
      %30 = sbr.rel (0) target = $region13
    $region12: #{tpu_custom_call.1} parent=1 // pred_region
      _
    $region13: #{tpu_custom_call.1} parent=1 // pred_fallthru
      _
    // Predicated region
    $region14: #{tpu_custom_call.1} parent=1 // pred_check
      _
    $region15: #{tpu_custom_call.1} parent=1 // pred_check_branch
      %32 = sbr.rel (0) target = $region17
    $region16: #{tpu_custom_call.1} parent=1 // pred_region
      %33 = dma.done [#allocation4], 16
    $region17: #{tpu_custom_call.1} parent=1 // pred_fallthru
      _
    // Predicated region
    $region18: #{tpu_custom_call.1} parent=1 // pred_check
      _
    $region19: #{tpu_custom_call.1} parent=1 // pred_check_branch
      %35 = sbr.rel (0) target = $region21
    $region20: #{tpu_custom_call.1} parent=1 // pred_region
      %36 = dma.done [#allocation5], 16
    $region21: #{tpu_custom_call.1} parent=1 // pred_fallthru
      _
    %37 = sfence
    %s38 = sld [smem:[#allocation2]]
    %s39 = sld [smem:[#allocation2 + $0x1]]
    %s40 = sld [smem:[#allocation2 + $0x2]]
    %s41 = sld [smem:[#allocation2 + $0x3]]
    %s42 = sld [smem:[#allocation2 + $0x4]]
    %s43 = sld [smem:[#allocation2 + $0x5]]
    %s44 = sld [smem:[#allocation2 + $0x6]]
    %s45 = sld [smem:[#allocation2 + $0x7]]
    %s46 = sld [smem:[#allocation6]]
    %s47 = sld [smem:[#allocation6 + $0x1]]
    %s48 = sld [smem:[#allocation6 + $0x2]]
    %s49 = sld [smem:[#allocation6 + $0x3]]
    %s50 = sld [smem:[#allocation6 + $0x4]]
    %s51 = sld [smem:[#allocation6 + $0x5]]
    %s52 = sld [smem:[#allocation6 + $0x6]]
    %s53 = sld [smem:[#allocation6 + $0x7]]
    %v54 = vld [vmem:[%s2] sm:$0xf]
    %55 = vrot.lane.b32.xlu0 %v54, 3
    %v56 = vpop.permute.xlu0 %55
    %v57 = vstv %s38
    %v58 = vmul.f32 %v57, %v56
    %v59 = vadd.f32 %v58, 0.0
    %v60 = vstv %s46
    %v61 = vmul.f32 %v60, %v56
    %v62 = vadd.f32 %v61, 0.0
    %63 = vrot.lane.b32.xlu0 %v54, 2
    %v64 = vpop.permute.xlu0 %63
    %v65 = vstv %s39
    %v66 = vmul.f32 %v65, %v64
    %v67 = vadd.f32 %v59, %v66
    %v68 = vstv %s47
    %v69 = vmul.f32 %v68, %v64
    %v70 = vadd.f32 %v62, %v69
    %71 = vrot.lane.b32.xlu0 %v54, 1
    %v72 = vpop.permute.xlu0 %71
    %v73 = vstv %s40
    %v74 = vmul.f32 %v73, %v72
    %v75 = vadd.f32 %v67, %v74
    %v76 = vstv %s48
    %v77 = vmul.f32 %v76, %v72
    %v78 = vadd.f32 %v70, %v77
    %v79 = vstv %s41
    %v80 = vmul.f32 %v79, %v54
    %v81 = vadd.f32 %v75, %v80
    %v82 = vstv %s49
    %v83 = vmul.f32 %v82, %v54
    %v84 = vadd.f32 %v78, %v83
    %85 = vrot.lane.b32.xlu0 %v54, 127
    %v86 = vpop.permute.xlu0 %85
    %v87 = vstv %s42
    %v88 = vmul.f32 %v87, %v86
    %v89 = vadd.f32 %v81, %v88
    %v90 = vstv %s50
    %v91 = vmul.f32 %v90, %v86
    %v92 = vadd.f32 %v84, %v91
    %93 = vrot.lane.b32.xlu0 %v54, 126
    %v94 = vpop.permute.xlu0 %93
    %v95 = vstv %s43
    %v96 = vmul.f32 %v95, %v94
    %v97 = vadd.f32 %v89, %v96
    %v98 = vstv %s51
    %v99 = vmul.f32 %v98, %v94
    %v100 = vadd.f32 %v92, %v99
    %101 = vrot.lane.b32.xlu0 %v54, 125
    %v102 = vpop.permute.xlu0 %101
    %v103 = vstv %s44
    %v104 = vmul.f32 %v103, %v102
    %v105 = vadd.f32 %v97, %v104
    %v106 = vstv %s52
    %v107 = vmul.f32 %v106, %v102
    %v108 = vadd.f32 %v100, %v107
    %109 = vrot.lane.b32.xlu0 %v54, 124
    %v110 = vpop.permute.xlu0 %109
    %v111 = vstv %s45
    %v112 = vmul.f32 %v111, %v110
    %v113 = vadd.f32 %v105, %v112
    %v114 = vstv %s53
    %v115 = vmul.f32 %v114, %v110
    %v116 = vadd.f32 %v108, %v115
    %117 = vst [vmem:[#allocation7] sm:$0xf] %v113
    %118 = vrot.lane.b32.xlu0 %v116, 6
    %v119 = vpop.permute.xlu0 %118
    %v120 = vmul.f32 %v57, %v119
    %v121 = vadd.f32 %v120, 0.0
    %v122 = vmul.f32 %v60, %v119
    %v123 = vadd.f32 %v122, 0.0
    %124 = vrot.lane.b32.xlu0 %v116, 4
    %v125 = vpop.permute.xlu0 %124
    %v126 = vmul.f32 %v65, %v125
    %v127 = vadd.f32 %v121, %v126
    %v128 = vmul.f32 %v68, %v125
    %v129 = vadd.f32 %v123, %v128
    %130 = vrot.lane.b32.xlu0 %v116, 2
    %v131 = vpop.permute.xlu0 %130
    %v132 = vmul.f32 %v73, %v131
    %v133 = vadd.f32 %v127, %v132
    %v134 = vmul.f32 %v76, %v131
    %v135 = vadd.f32 %v129, %v134
    %v136 = vmul.f32 %v79, %v116
    %v137 = vadd.f32 %v133, %v136
    %v138 = vmul.f32 %v82, %v116
    %v139 = vadd.f32 %v135, %v138
    %140 = vrot.lane.b32.xlu0 %v116, 126
    %v141 = vpop.permute.xlu0 %140
    %v142 = vmul.f32 %v87, %v141
    %v143 = vadd.f32 %v137, %v142
    %v144 = vmul.f32 %v90, %v141
    %v145 = vadd.f32 %v139, %v144
    %146 = vrot.lane.b32.xlu0 %v116, 124
    %v147 = vpop.permute.xlu0 %146
    %v148 = vmul.f32 %v95, %v147
    %v149 = vadd.f32 %v143, %v148
    %v150 = vmul.f32 %v98, %v147
    %v151 = vadd.f32 %v145, %v150
    %152 = vrot.lane.b32.xlu0 %v116, 122
    %v153 = vpop.permute.xlu0 %152
    %v154 = vmul.f32 %v103, %v153
    %v155 = vadd.f32 %v149, %v154
    %v156 = vmul.f32 %v106, %v153
    %v157 = vadd.f32 %v151, %v156
    %158 = vrot.lane.b32.xlu0 %v116, 120
    %v159 = vpop.permute.xlu0 %158
    %v160 = vmul.f32 %v111, %v159
    %v161 = vadd.f32 %v155, %v160
    %v162 = vmul.f32 %v114, %v159
    %v163 = vadd.f32 %v157, %v162
    %164 = vst [vmem:[#allocation7 + $0x4] sm:$0xf] %v161
    %165 = vrot.lane.b32.xlu0 %v163, 12
    %v166 = vpop.permute.xlu0 %165
    %v167 = vmul.f32 %v57, %v166
    %v168 = vadd.f32 %v167, 0.0
    %v169 = vmul.f32 %v60, %v166
    %v170 = vadd.f32 %v169, 0.0
    %171 = vrot.lane.b32.xlu0 %v163, 8
    %v172 = vpop.permute.xlu0 %171
    %v173 = vmul.f32 %v65, %v172
    %v174 = vadd.f32 %v168, %v173
    %v175 = vmul.f32 %v68, %v172
    %v176 = vadd.f32 %v170, %v175
    %177 = vrot.lane.b32.xlu0 %v163, 4
    %v178 = vpop.permute.xlu0 %177
    %v179 = vmul.f32 %v73, %v178
    %v180 = vadd.f32 %v174, %v179
    %v181 = vmul.f32 %v76, %v178
    %v182 = vadd.f32 %v176, %v181
    %v183 = vmul.f32 %v79, %v163
    %v184 = vadd.f32 %v180, %v183
    %v185 = vmul.f32 %v82, %v163
    %v186 = vadd.f32 %v182, %v185
    %187 = vrot.lane.b32.xlu0 %v163, 124
    %v188 = vpop.permute.xlu0 %187
    %v189 = vmul.f32 %v87, %v188
    %v190 = vadd.f32 %v184, %v189
    %v191 = vmul.f32 %v90, %v188
    %v192 = vadd.f32 %v186, %v191
    %193 = vrot.lane.b32.xlu0 %v163, 120
    %v194 = vpop.permute.xlu0 %193
    %v195 = vmul.f32 %v95, %v194
    %v196 = vadd.f32 %v190, %v195
    %v197 = vmul.f32 %v98, %v194
    %v198 = vadd.f32 %v192, %v197
    %199 = vrot.lane.b32.xlu0 %v163, 116
    %v200 = vpop.permute.xlu0 %199
    %v201 = vmul.f32 %v103, %v200
    %v202 = vadd.f32 %v196, %v201
    %v203 = vmul.f32 %v106, %v200
    %v204 = vadd.f32 %v198, %v203
    %205 = vrot.lane.b32.xlu0 %v163, 112
    %v206 = vpop.permute.xlu0 %205
    %v207 = vmul.f32 %v111, %v206
    %v208 = vadd.f32 %v202, %v207
    %v209 = vmul.f32 %v114, %v206
    %v210 = vadd.f32 %v204, %v209
    %211 = vst [vmem:[#allocation7 + $0x8] sm:$0xf] %v208
    %212 = vst [vmem:[#allocation7 + $0xc] sm:$0xf] %v210
    // Predicated region
    $region22: #{tpu_custom_call.1} parent=1 // pred_check
      _
    $region23: #{tpu_custom_call.1} parent=1 // pred_check_branch
      %214 = sbr.rel (0) target = $region25
    $region24: #{tpu_custom_call.1} parent=1 // pred_region
      %s216 = ssub.s32 256, 256
      %217 = vsyncadd [#allocation3], %s216
      %s219 = sshll.u32 [#allocation7], 4
      %s220 = int_to_ptr.vmem [resolvable:$true] %s219
      %222 = dma.vmem_to_hbm [thread:$0]  %s220, 256, %s3, [#allocation3]
    $region25: #{tpu_custom_call.1} parent=1 // pred_fallthru
      _
    // Predicated region
    $region26: #{tpu_custom_call.1} parent=1 // pred_check
      _
    $region27: #{tpu_custom_call.1} parent=1 // pred_check_branch
      %224 = sbr.rel (0) target = $region29
    $region28: #{tpu_custom_call.1} parent=1 // pred_region
      %225 = dma.done [#allocation3], 256
    $region29: #{tpu_custom_call.1} parent=1 // pred_fallthru
      _
    %226 = vsyncpa [#allocation3], 1
    %227 = vsyncpa [#allocation4], 1
    %228 = vsyncpa [#allocation5], 1

</llo_original>
